<compile_context>
chip_gen: v5e
topology: v5e:2x2
jax: 0.10.0
libtpu: 0.0.40
codegen_flags: <defaults>
</compile_context>

<pallas_src>
import jax
import jax.numpy as jnp
from jax.experimental import pallas as pl
from jax.experimental.pallas import tpu as pltpu


def _chip_config():
    """Per-generation (target_block_bytes, vmem_limit_bytes, use_core_parallel)."""
    kind = ""
    try:
        kind = (jax.devices()[0].device_kind or "").lower()
    except Exception:
        pass
    if "v7" in kind:
        # 3.2 TB/s HBM: big blocks amortize the ~0.35us/step cost; 2x
        # double-buffered in+out = 32 MiB, so raise the scoped-VMEM limit.
        return 8 << 20, 48 << 20, True
    if "v6" in kind:
        return 4 << 20, None, False      # 16 MiB total < 32 MiB scoped default
    # v5e and anything unknown: conservative; 8 MiB total < 16 MiB scoped default.
    return 2 << 20, None, False


def _choose_slab(n_elems, itemsize, target_block_bytes):
    """Pick (lanes, rows, block_rows) for a lane-dense (rows, lanes) slab."""
    lanes = 128
    for cand in (2048, 1024, 512, 256, 128):
        if n_elems % cand == 0:
            lanes = cand
            break
    rows = n_elems // lanes
    # Sublane packing of the I/O dtype keeps blocks full-vreg aligned.
    pack = {4: 8, 2: 16, 1: 32}.get(itemsize, 8)
    target_rows = max(pack, target_block_bytes // (lanes * itemsize))
    if rows <= target_rows:
        block_rows = rows                 # single block == full dim -> always legal
    else:
        block_rows = max(pack, (target_rows // pack) * pack)
    return lanes, rows, block_rows


def _make_kernel(elem_fn, n_scalar_operands):
    def kernel(*refs):
        scalars = tuple(refs[i][0] for i in range(n_scalar_operands))   # SMEM f32
        x_ref = refs[n_scalar_operands]
        o_ref = refs[n_scalar_operands + 1]
        xf = x_ref[...].astype(jnp.float32)   # f32 math path (v5e: no bf16 VPU/EUP)
        o_ref[...] = elem_fn(xf, *scalars).astype(o_ref.dtype)
    return kernel


def biased_tanh(x, b=0.5, k=1.0, *, target_block_bytes=None):
    """Pallas implementation of BiasedTanh.forward; b=None / k=None mirror
    bias=False / weight=False."""
    if b is None and k is None:
        return x

    # --- parameters: fold Python scalars into the kernel, SMEM for traced arrays.
    scalar_operands = []

    def as_param(p):
        if p is None:
            return None, None
        if isinstance(p, (int, float)):
            return float(p), None
        idx = len(scalar_operands)
        scalar_operands.append(jnp.asarray(p, jnp.float32).reshape((1,)))
        return None, idx

    b_const, b_idx = as_param(b)
    k_const, k_idx = as_param(k)

    def elem_fn(xf, *scalars):
        y = xf
        if b is not None:
            bb = b_const if b_idx is None else scalars[b_idx]
            y = jnp.tanh(y) + bb
        if k is not None:
            kk = k_const if k_idx is None else scalars[k_idx]
            y = kk * y
        return y

    orig_shape = x.shape
    dtype = x.dtype
    n = x.size
    x_flat = jnp.ravel(x)

    # --- <=127-element tail handled with plain jnp instead of a pad/slice pass.
    n_main = (n // 128) * 128
    tail = None
    if n_main < n:
        scalar_vals = [s[0] for s in scalar_operands]
        tail = elem_fn(x_flat[n_main:].astype(jnp.float32), *scalar_vals).astype(dtype)
    if n_main == 0:
        return tail.reshape(orig_shape)

    tb, vmem_limit, use_core_parallel = _chip_config()
    if target_block_bytes is not None:
        tb = int(target_block_bytes)

    itemsize = jnp.dtype(dtype).itemsize
    lanes, rows, block_rows = _choose_slab(n_main, itemsize, tb)
    x_main = x_flat if n_main == n else x_flat[:n_main]
    x2d = x_main.reshape(rows, lanes)

    grid = (pl.cdiv(rows, block_rows),)       # ragged last row-block is OOB-masked
    if use_core_parallel and grid[0] >= 2:
        dim_sem = (pltpu.CORE_PARALLEL,)      # shard row-blocks across v7x's 2 TCs
    else:
        dim_sem = ("parallel",)

    cp = dict(dimension_semantics=dim_sem)
    if vmem_limit is not None:
        cp["vmem_limit_bytes"] = vmem_limit

    in_specs = [pl.BlockSpec(memory_space=pltpu.MemorySpace.SMEM)
                for _ in scalar_operands]
    in_specs.append(pl.BlockSpec((block_rows, lanes), lambda i: (i, 0)))

    out2d = pl.pallas_call(
        _make_kernel(elem_fn, len(scalar_operands)),
        out_shape=jax.ShapeDtypeStruct((rows, lanes), dtype),
        grid=grid,
        in_specs=in_specs,
        out_specs=pl.BlockSpec((block_rows, lanes), lambda i: (i, 0)),
        compiler_params=pltpu.CompilerParams(**cp),
    )(*scalar_operands, x2d)

    out_flat = out2d.reshape(-1)
    if tail is not None:
        out_flat = jnp.concatenate([out_flat, tail])
    return out_flat.reshape(orig_shape)


def _ref(x, b=0.5, k=1.0):
    y = x.astype(jnp.float32)
    if b is not None:
        y = jnp.tanh(y) + b
    if k is not None:
        y = k * y
    return y.astype(x.dtype)


if __name__ == "__main__":
    key = jax.random.PRNGKey(0)
    k0, k1, k2, k3 = jax.random.split(key, 4)
    b, kk = 0.5, 1.0   # nn.Parameter(torch.tensor(0.5)) / nn.Parameter(torch.tensor(1.0))

    # 1) Small NCHW input, 128-aligned flat size (constant-folded params, single block).
    x = jax.random.normal(k0, (2, 4, 16, 16), dtype=jnp.float32)
    out = jax.block_until_ready(biased_tanh(x, b, kk))
    assert out.shape == x.shape and out.dtype == x.dtype
    assert jnp.allclose(out, _ref(x, b, kk), atol=1e-5), "mismatch (aligned)"

    # 2) Non-128-aligned flat size: kernel on the aligned prefix + jnp tail.
    x2 = jax.random.normal(k1, (3, 5, 7, 11), dtype=jnp.float32)
    out2 = jax.block_until_ready(biased_tanh(x2, b, kk))
    assert out2.shape == x2.shape
    assert jnp.allclose(out2, _ref(x2, b, kk), atol=1e-5), "mismatch (unaligned tail)"

    # 3) Ragged final row-block (rows > block_rows, rows % block_rows != 0),
    #    forced with a small block override -> multi-block grid + OOB masking.
    x3 = jax.random.normal(k2, (100, 128), dtype=jnp.float32)
    out3 = jax.block_until_ready(biased_tanh(x3, b, kk, target_block_bytes=16 * 1024))
    assert jnp.allclose(out3, _ref(x3, b, kk), atol=1e-5), "mismatch (ragged block)"

    # 4) Traced parameters -> SMEM scalar path.
    bt = jnp.array(0.5, dtype=jnp.float32)
    kt = jnp.array(1.0, dtype=jnp.float32)
    out4 = jax.block_until_ready(biased_tanh(x, bt, kt))
    assert jnp.allclose(out4, _ref(x, b, kk), atol=1e-5), "mismatch (SMEM params)"

    # 5) bias=False / weight=False module variants.
    out5 = jax.block_until_ready(biased_tanh(x, None, 2.0))      # k * x (no tanh)
    assert jnp.allclose(out5, 2.0 * x, atol=1e-5), "mismatch (bias=False)"
    out6 = jax.block_until_ready(biased_tanh(x, 0.5, None))      # tanh(x) + b
    assert jnp.allclose(out6, jnp.tanh(x) + 0.5, atol=1e-5), "mismatch (weight=False)"

    # 6) bf16 I/O (16-row sublane packing; math still f32 in-kernel).
    x7 = jax.random.normal(k3, (4, 8, 128), dtype=jnp.bfloat16)
    out7 = jax.block_until_ready(biased_tanh(x7, b, kk))
    assert out7.dtype == jnp.bfloat16
    assert jnp.allclose(out7.astype(jnp.float32),
                        _ref(x7, b, kk).astype(jnp.float32), atol=2e-2), "mismatch (bf16)"

    print("KERNEL_OK")
</pallas_src>

<mosaic_0001>
module attributes {stable_mosaic.version = 11 : i64} {
  func.func @kernel(%arg0: i32, %arg1: memref<1x2048xf32, #tpu.memory_space<vmem>>, %arg2: memref<1x2048xf32, #tpu.memory_space<vmem>>) attributes {dimension_semantics = [#tpu.dimension_semantics<parallel>], iteration_bounds = array<i64: 1>, scalar_prefetch = 0 : i64, scratch_operands = 0 : i64, tpu.core_type = #tpu.core_type<tc>, window_params = [{transform_indices = @transform_0, window_bounds = array<i64: 1, 2048>}, {transform_indices = @transform_1, window_bounds = array<i64: 1, 2048>}]} {
    %c0 = arith.constant 0 : index
    %c0_0 = arith.constant 0 : index
    %0 = vector.load %arg1[%c0, %c0_0] : memref<1x2048xf32, #tpu.memory_space<vmem>>, vector<1x2048xf32>
    %1 = math.tanh %0 : vector<1x2048xf32>
    %cst = arith.constant 5.000000e-01 : f32
    %2 = vector.broadcast %cst : f32 to vector<1x2048xf32>
    %3 = arith.addf %1, %2 : vector<1x2048xf32>
    %cst_1 = arith.constant 1.000000e+00 : f32
    %4 = vector.broadcast %cst_1 : f32 to vector<1x2048xf32>
    %5 = arith.mulf %4, %3 : vector<1x2048xf32>
    %c0_2 = arith.constant 0 : index
    %c0_3 = arith.constant 0 : index
    %6 = vector.load %arg2[%c0_2, %c0_3] : memref<1x2048xf32, #tpu.memory_space<vmem>>, vector<1x2048xf32>
    tpu.vector_store %arg2[%c0_2, %c0_3], %5 {strides = array<i32>} : memref<1x2048xf32, #tpu.memory_space<vmem>>, vector<1x2048xf32>,
    return
  }
  func.func @transform_0(%arg0: i32) -> (i32, i32) {
    %c0_i32 = arith.constant 0 : i32
    %c0_i32_0 = arith.constant 0 : i32
    return %arg0, %c0_i32 : i32, i32
  }
  func.func @transform_1(%arg0: i32) -> (i32, i32) {
    %c0_i32 = arith.constant 0 : i32
    %c0_i32_0 = arith.constant 0 : i32
    return %arg0, %c0_i32 : i32, i32
  }
}

</mosaic_0001>

<llo_original>
// kernel: tpu_custom_call.1
$region0: #{tpu_custom_call.1}
  #allocation0 [shape = 'u32[]', space=smem, size = 0x4, offset = 0x4, fixed_abs, tag = 'smem constant byte address 0x4 - core index']
  #allocation1 [shape = 'u32[72,128]{1,0:T(1,128)}', space=vmem, size = 0x9000, scoped, tag = 'internal scratch']
  %s0 = inlined_call_operand.hbm [shape: f32[1,2048], index: 0, kind: input, shape index: {}]
  %s1 = inlined_call_operand.hbm [shape: f32[1,2048], index: 1, kind: output, shape index: {}]
  %s2 = sld [smem:[#allocation0]]
  $region18: #{tpu_custom_call.1} parent=0
    _
  %s4 = ssub.s32 1, %s2
  %s5 = scalar_select 0, %s4, %s2
  $region1: #{tpu_custom_call.1} parent=0
    #allocation2 [shape = 'u8[8192]{0}', space=vmem, size = 0x2000, scoped, tag = 'input window, operand 0, single buffered']
    #allocation3 [shape = 's32[1]{0}', space=sflag, size = 0x4, scoped, tag = 'scoped memory for tpu_custom_call.1']
    #allocation4 [shape = 's32[1]{0}', space=sflag, size = 0x4, scoped, tag = 'scoped memory for tpu_custom_call.1']
    #allocation5 [shape = 'u8[8192]{0}', space=vmem, size = 0x2000, scoped, tag = 'output window, operand 0, single buffered']
    %6 = vsyncpa [#allocation3], 0
    %7 = vsyncpa [#allocation4], 0
    // Predicated region
    $region2: #{tpu_custom_call.1} parent=1 // pred_check
      _
    $region3: #{tpu_custom_call.1} parent=1 // pred_check_branch
      %9 = sbr.rel (0) target = $region5
    $region4: #{tpu_custom_call.1} parent=1 // pred_region
      %11 = vsyncadd [#allocation3], 0
      %s13 = sshll.u32 %s0, 4
      %s14 = int_to_ptr.hbm [resolvable:$true] %s13
      %s15 = sshll.u32 [#allocation2], 4
      %s16 = int_to_ptr.vmem [resolvable:$true] %s15
      %18 = dma.hbm_to_vmem [thread:$0]  %s14, 256, %s16, [#allocation3]
    $region5: #{tpu_custom_call.1} parent=1 // pred_fallthru
      _
    // Predicated region
    $region6: #{tpu_custom_call.1} parent=1 // pred_check
      _
    $region7: #{tpu_custom_call.1} parent=1 // pred_check_branch
      %20 = sbr.rel (0) target = $region9
    $region8: #{tpu_custom_call.1} parent=1 // pred_region
      %22 = dma.done [#allocation3], 256
    $region9: #{tpu_custom_call.1} parent=1 // pred_fallthru
      _
    %v23 = vld [vmem:[#allocation2] sm:$0xff]
    %v24 = vld [vmem:[#allocation2 + $0x8] sm:$0xff]
    %v25 = vtanh.pop %v23
    %v26 = vtanh.pop %v24
    %v27 = vadd.f32 %v25, 0.5
    %v28 = vadd.f32 %v26, 0.5
    %29 = vst [vmem:[#allocation5] sm:$0xff] %v27
    %30 = vst [vmem:[#allocation5 + $0x8] sm:$0xff] %v28
    // Predicated region
    $region10: #{tpu_custom_call.1} parent=1 // pred_check
      _
    $region11: #{tpu_custom_call.1} parent=1 // pred_check_branch
      %32 = sbr.rel (0) target = $region13
    $region12: #{tpu_custom_call.1} parent=1 // pred_region
      %34 = vsyncadd [#allocation4], 0
      %s36 = sshll.u32 [#allocation5], 4
      %s37 = int_to_ptr.vmem [resolvable:$true] %s36
      %s38 = sshll.u32 %s1, 4
      %s39 = int_to_ptr.hbm [resolvable:$true] %s38
      %41 = dma.vmem_to_hbm [thread:$0]  %s37, 256, %s39, [#allocation4]
    $region13: #{tpu_custom_call.1} parent=1 // pred_fallthru
      _
    // Predicated region
    $region14: #{tpu_custom_call.1} parent=1 // pred_check
      _
    $region15: #{tpu_custom_call.1} parent=1 // pred_check_branch
      %43 = sbr.rel (0) target = $region17
    $region16: #{tpu_custom_call.1} parent=1 // pred_region
      %45 = dma.done [#allocation4], 256
    $region17: #{tpu_custom_call.1} parent=1 // pred_fallthru
      _
    %46 = vsyncpa [#allocation3], 1
    %47 = vsyncpa [#allocation4], 1

</llo_original>
